<compile_context>
chip_gen: v6e
topology: v6e:2x2x1
jax: 0.10.0
libtpu: 0.0.40
codegen_flags: <defaults>
</compile_context>

<pallas_src>
import functools

import jax
import jax.numpy as jnp
from jax.experimental import pallas as pl
from jax.experimental.pallas import tpu as pltpu


_CHUNK = 256   # contraction-axis chunk (rows of the fused table per matmul)


def _round_up(x, m):
    return ((x + m - 1) // m) * m


def _vmem_params():
    """Generation-aware (vmem_budget, vmem_limit) in bytes."""
    cap = 64 * 1024 * 1024                      # conservative default (v7x per-TC)
    try:
        cap = int(pltpu.get_tpu_info().vmem_capacity_bytes)
    except Exception:
        pass
    if cap >= 128 * 1024 * 1024:                # v5e / v6e: 128 MiB physical VMEM
        return 64 * 1024 * 1024, 96 * 1024 * 1024
    # v7x (64 MiB per TensorCore) or unknown: explicit headroom for compiler temps.
    return 28 * 1024 * 1024, 44 * 1024 * 1024


def _degree_encoder_kernel(degs_ref, tbl_ref, o_ref, *, k_rows, rp, g, dp):
    """One grid step over tm packed output rows (= tm * g nodes).

    degs_ref : (tm, 2g) int32 -- columns [in_0..in_{g-1}, out_0..out_{g-1}]
    tbl_ref  : (rp, dp)       -- fused table: rows [0,K)=E_in, [K,2K)=E_out, rest 0
    o_ref    : (tm, g*dp)     -- packed, lane-dense output (g*dp == 128 when dp < 128)
    """
    tm = o_ref.shape[0]
    cdt = tbl_ref.dtype                               # one-hot in table dtype (0/1 exact)

    degs = degs_ref[...]                                              # (tm, 2g) int32
    din = jnp.clip(degs[:, 0:g], 0, k_rows - 1)                       # rows [0, K)
    dout = jnp.clip(degs[:, g:2 * g], 0, k_rows - 1) + k_rows         # rows [K, 2K)

    parts = []
    for j in range(g):                                # g = 128 // dp, small & unrolled
        sel_in = din[:, j:j + 1]                      # (tm, 1)
        sel_out = dout[:, j:j + 1]
        if rp <= _CHUNK:
            # Common small-max_degree case: single matmul, no accumulator/zero-init.
            col = jax.lax.broadcasted_iota(jnp.int32, (tm, rp), 1)
            one_hot = ((col == sel_in) | (col == sel_out)).astype(cdt)
            res = jnp.dot(one_hot, tbl_ref[...], preferred_element_type=jnp.float32)
        else:
            res = jnp.zeros((tm, dp), jnp.float32)
            for c in range(0, rp, _CHUNK):            # rp is a multiple of 8
                ck = min(_CHUNK, rp - c)
                col = c + jax.lax.broadcasted_iota(jnp.int32, (tm, ck), 1)
                one_hot = ((col == sel_in) | (col == sel_out)).astype(cdt)
                res += jnp.dot(one_hot, tbl_ref[c:c + ck, :],
                               preferred_element_type=jnp.float32)
        parts.append(res)

    packed = parts[0] if g == 1 else jnp.concatenate(parts, axis=-1)  # (tm, g*dp)
    o_ref[...] = packed.astype(o_ref.dtype)


def build_fused_table(table_in, table_out, compute_dtype=None):
    """Fuse the two embedding tables into one (rp, dp) table.

    Static per model -- call once alongside the weights, not per forward pass.
    Rows [0, K) hold E_in, rows [K, 2K) hold E_out, remaining rows are zero padding.
    Columns are zero-padded from D up to dp (nearest divisor of 128 when D < 128,
    else the next multiple of 128) so every output store is full-lane.
    """
    k_rows, d = table_in.shape
    assert table_out.shape == (k_rows, d)
    dtype = compute_dtype if compute_dtype is not None else table_in.dtype
    if d >= 128:
        dp = _round_up(d, 128)
    else:
        dp = min(int(pl.next_power_of_2(d)), 128)     # divisors of 128 are powers of 2
    rp = _round_up(2 * k_rows, 8)
    fused = jnp.zeros((rp, dp), dtype)
    fused = fused.at[:k_rows, :d].set(table_in.astype(dtype))
    fused = fused.at[k_rows:2 * k_rows, :d].set(table_out.astype(dtype))
    return fused, k_rows, d


def degree_encoder_fused(in_degree, out_degree, fused_table, k_rows, d,
                         *, out_dtype=None, tile_n=4096):
    """Pallas TPU DegreeEncoder forward (direction='both') from a prebuilt fused table."""
    rp, dp = fused_table.shape
    n = in_degree.shape[0]
    out_dtype = out_dtype if out_dtype is not None else fused_table.dtype
    out_isz = jnp.dtype(out_dtype).itemsize
    tbl_isz = jnp.dtype(fused_table.dtype).itemsize

    g = 128 // dp if dp < 128 else 1          # nodes packed per 128-lane output row
    dlanes = g * dp
    step = 8 * g                              # tile_n granularity (tm multiple of 8)
    ck = min(rp, _CHUNK)

    budget, limit = _vmem_params()

    def footprint(tn):
        tm = tn // g
        deg_b = 2 * tm * 2 * g * 4                       # packed degrees (double-buffered)
        out_b = 2 * tm * dlanes * out_isz                # output tile (double-buffered)
        tbl_b = 2 * rp * dp * tbl_isz                    # fused table block (tiny now)
        inter = 8 * tm * ck * 4 + 2 * tm * dlanes * 4    # iota/one-hot/acc/packed temps
        return deg_b + out_b + tbl_b + inter

    # Largest tile that fits the budget, capped at what N actually needs.
    tile_n = max(step, _round_up(min(tile_n, _round_up(n, step)), step))
    while tile_n > step and footprint(tile_n) > budget:
        tile_n = max(step, ((tile_n // 2) // step) * step)
    # v7x megacore: the 1-D "parallel" grid shards across 2 TensorCores -- prefer
    # >= 2 grid steps (shrink the tile rather than run one oversized step).
    if n > step and _round_up(n, tile_n) // tile_n < 2:
        tile_n = max(step, _round_up((n + 1) // 2, step))

    np_ = _round_up(n, tile_n)
    grid = np_ // tile_n
    tm = tile_n // g

    # Pack degrees: (np_/g, 2g) int32 => one narrow DMA per grid step.
    pad = np_ - n
    din = jnp.pad(in_degree.astype(jnp.int32), (0, pad)).reshape(np_ // g, g)
    dou = jnp.pad(out_degree.astype(jnp.int32), (0, pad)).reshape(np_ // g, g)
    degs = jnp.concatenate([din, dou], axis=1)

    kernel = functools.partial(_degree_encoder_kernel, k_rows=k_rows, rp=rp, g=g, dp=dp)

    out_packed = pl.pallas_call(
        kernel,
        out_shape=jax.ShapeDtypeStruct((np_ // g, dlanes), out_dtype),
        grid_spec=pltpu.PrefetchScalarGridSpec(
            num_scalar_prefetch=0,
            grid=(grid,),
            in_specs=[
                pl.BlockSpec((tm, 2 * g), lambda i: (i, 0)),
                # Grid-invariant fused table (index_map constant -> fetched once per
                # core by the pipeline).  With the block-diagonal widening dropped it
                # is g^2x smaller, so double-buffering it costs almost nothing.
                # TODO(synk): switch to pipeline_mode=pl.Buffered(1) once verified on
                # all generations to reclaim the second (tiny) buffer.
                pl.BlockSpec((rp, dp), lambda i: (0, 0)),
            ],
            out_specs=pl.BlockSpec((tm, dlanes), lambda i: (i, 0)),
        ),
        compiler_params=pltpu.CompilerParams(
            dimension_semantics=("parallel",),
            vmem_limit_bytes=limit,
        ),
    )(degs, fused_table)

    # Packed (np_/g, g*dp) -> (np_, dp) is a contiguous, free reshape.
    out = out_packed.reshape(np_, dp)
    if dp != d:
        out = out[:, :d]            # drop lane padding columns
    return out[:n]                  # drop tail-padding rows


def degree_encoder(in_degree, out_degree, table_in, table_out,
                   *, tile_n=4096, compute_dtype=None):
    """Convenience wrapper: builds the fused table then runs the kernel.

    For repeated forward passes, hoist build_fused_table() out of the hot path and
    call degree_encoder_fused() directly (the table is static per model).
    """
    fused, k_rows, d = build_fused_table(table_in, table_out, compute_dtype)
    return degree_encoder_fused(in_degree, out_degree, fused, k_rows, d,
                                out_dtype=table_in.dtype, tile_n=tile_n)


def _make_embedding_table(key, num_embeddings, embedding_dim):
    # nn.Embedding init: N(0, 1); padding_idx=0 -> row 0 zeroed.
    tbl = jax.random.normal(key, (num_embeddings, embedding_dim), jnp.float32)
    return tbl.at[0].set(0.0)


if __name__ == "__main__":
    max_degree = 5
    embedding_dim = 32
    num_nodes = 600   # not a multiple of the tile -> exercises tail padding; grid = 2

    key = jax.random.PRNGKey(0)
    k1, k2, k3, k4 = jax.random.split(key, 4)

    # Deterministic embedding tables (direction="both" => two tables).
    table_in = _make_embedding_table(k1, max_degree + 1, embedding_dim)
    table_out = _make_embedding_table(k2, max_degree + 1, embedding_dim)

    # Synthetic graph degrees (would come from g.in_degrees()/g.out_degrees()).
    # TODO(synk): DGL graph handling (to_homogeneous, degree computation) stays host-side.
    in_degree = jax.random.randint(k3, (num_nodes,), 0, max_degree + 3, jnp.int32)
    out_degree = jax.random.randint(k4, (num_nodes,), 0, max_degree + 3, jnp.int32)

    # Plain-JAX reference (clamp + gather + add), mirrors the PyTorch module.
    idx_in = jnp.clip(in_degree, 0, max_degree)
    idx_out = jnp.clip(out_degree, 0, max_degree)
    ref = table_in[idx_in] + table_out[idx_out]

    # --- default f32 path: bit-for-bit comparable to the reference -------------
    out = jax.block_until_ready(
        degree_encoder(in_degree, out_degree, table_in, table_out))
    assert out.shape == (num_nodes, embedding_dim)
    assert jnp.allclose(out, ref, atol=1e-5, rtol=1e-5), "f32 path mismatch"

    # --- bf16 compute path (recommended on v6e/v7x): only the stored embedding
    #     row values round to bf16; the 0/1 one-hot and the f32 accumulate are exact.
    out_bf16 = jax.block_until_ready(
        degree_encoder(in_degree, out_degree, table_in, table_out,
                       compute_dtype=jnp.bfloat16))
    ref_bf16 = (table_in.astype(jnp.bfloat16).astype(jnp.float32)[idx_in]
                + table_out.astype(jnp.bfloat16).astype(jnp.float32)[idx_out])
    assert jnp.allclose(out_bf16, ref_bf16, atol=1e-5, rtol=1e-5), "bf16 path mismatch"

    print("KERNEL_OK")
</pallas_src>

<mosaic_0001>
module attributes {stable_mosaic.version = 11 : i64} {
  func.func @_degree_encoder_kernel(%arg0: i32, %arg1: memref<80x8xi32, #tpu.memory_space<vmem>>, %arg2: memref<16x32xf32, #tpu.memory_space<vmem>>, %arg3: memref<80x128xf32, #tpu.memory_space<vmem>>) attributes {dimension_semantics = [#tpu.dimension_semantics<parallel>], iteration_bounds = array<i64: 2>, scalar_prefetch = 0 : i64, scratch_operands = 0 : i64, tpu.core_type = #tpu.core_type<tc>, window_params = [{transform_indices = @transform_0, window_bounds = array<i64: 80, 8>}, {pipeline_mode = #tpu.pipeline_mode<synchronous>, transform_indices = @transform_1, window_bounds = array<i64: 16, 32>}, {transform_indices = @transform_2, window_bounds = array<i64: 80, 128>}]} {
    %c0 = arith.constant 0 : index
    %c0_0 = arith.constant 0 : index
    %0 = vector.load %arg1[%c0, %c0_0] : memref<80x8xi32, #tpu.memory_space<vmem>>, vector<80x8xi32>
    %1 = vector.extract_strided_slice %0 {offsets = [0, 0], sizes = [80, 4], strides = [1, 1]} : vector<80x8xi32> to vector<80x4xi32>
    %c0_i32 = arith.constant 0 : i32
    %c5_i32 = arith.constant 5 : i32
    %2 = vector.broadcast %c0_i32 : i32 to vector<80x4xi32>
    %3 = arith.maxsi %2, %1 : vector<80x4xi32>
    %4 = vector.broadcast %c5_i32 : i32 to vector<80x4xi32>
    %5 = arith.minsi %4, %3 : vector<80x4xi32>
    %6 = vector.extract_strided_slice %0 {offsets = [0, 4], sizes = [80, 4], strides = [1, 1]} : vector<80x8xi32> to vector<80x4xi32>
    %c0_i32_1 = arith.constant 0 : i32
    %c5_i32_2 = arith.constant 5 : i32
    %7 = vector.broadcast %c0_i32_1 : i32 to vector<80x4xi32>
    %8 = arith.maxsi %7, %6 : vector<80x4xi32>
    %9 = vector.broadcast %c5_i32_2 : i32 to vector<80x4xi32>
    %10 = arith.minsi %9, %8 : vector<80x4xi32>
    %c6_i32 = arith.constant 6 : i32
    %11 = vector.broadcast %c6_i32 : i32 to vector<80x4xi32>
    %12 = arith.addi %10, %11 : vector<80x4xi32>
    %13 = vector.extract_strided_slice %5 {offsets = [0, 0], sizes = [80, 1], strides = [1, 1]} : vector<80x4xi32> to vector<80x1xi32>
    %14 = vector.extract_strided_slice %12 {offsets = [0, 0], sizes = [80, 1], strides = [1, 1]} : vector<80x4xi32> to vector<80x1xi32>
    %15 = tpu.iota {dimensions = array<i32: 1>} : vector<80x16xi32>
    %16 = vector.broadcast %13 : vector<80x1xi32> to vector<80x16xi32>
    %17 = arith.cmpi eq, %15, %16 : vector<80x16xi32>
    %18 = vector.broadcast %14 : vector<80x1xi32> to vector<80x16xi32>
    %19 = arith.cmpi eq, %15, %18 : vector<80x16xi32>
    %20 = arith.ori %17, %19 : vector<80x16xi1>
    %21 = arith.extui %20 : vector<80x16xi1> to vector<80x16xi32>
    %22 = arith.sitofp %21 : vector<80x16xi32> to vector<80x16xf32>
    %c0_3 = arith.constant 0 : index
    %c0_4 = arith.constant 0 : index
    %23 = vector.load %arg2[%c0_3, %c0_4] : memref<16x32xf32, #tpu.memory_space<vmem>>, vector<16x32xf32>
    %cst = arith.constant dense<0.000000e+00> : vector<80x32xf32>
    %24 = tpu.matmul %22, %23, %cst {dimension_numbers = #tpu.dot_dimension_numbers<[1], [0], [0], [1], [0, 0, 1, 1], [], []>} : vector<80x16xf32>, vector<16x32xf32>, vector<80x32xf32> -> vector<80x32xf32>
    %25 = vector.extract_strided_slice %5 {offsets = [0, 1], sizes = [80, 1], strides = [1, 1]} : vector<80x4xi32> to vector<80x1xi32>
    %26 = vector.extract_strided_slice %12 {offsets = [0, 1], sizes = [80, 1], strides = [1, 1]} : vector<80x4xi32> to vector<80x1xi32>
    %27 = tpu.iota {dimensions = array<i32: 1>} : vector<80x16xi32>
    %28 = vector.broadcast %25 : vector<80x1xi32> to vector<80x16xi32>
    %29 = arith.cmpi eq, %27, %28 : vector<80x16xi32>
    %30 = vector.broadcast %26 : vector<80x1xi32> to vector<80x16xi32>
    %31 = arith.cmpi eq, %27, %30 : vector<80x16xi32>
    %32 = arith.ori %29, %31 : vector<80x16xi1>
    %33 = arith.extui %32 : vector<80x16xi1> to vector<80x16xi32>
    %34 = arith.sitofp %33 : vector<80x16xi32> to vector<80x16xf32>
    %c0_5 = arith.constant 0 : index
    %c0_6 = arith.constant 0 : index
    %35 = vector.load %arg2[%c0_5, %c0_6] : memref<16x32xf32, #tpu.memory_space<vmem>>, vector<16x32xf32>
    %cst_7 = arith.constant dense<0.000000e+00> : vector<80x32xf32>
    %36 = tpu.matmul %34, %35, %cst_7 {dimension_numbers = #tpu.dot_dimension_numbers<[1], [0], [0], [1], [0, 0, 1, 1], [], []>} : vector<80x16xf32>, vector<16x32xf32>, vector<80x32xf32> -> vector<80x32xf32>
    %37 = vector.extract_strided_slice %5 {offsets = [0, 2], sizes = [80, 1], strides = [1, 1]} : vector<80x4xi32> to vector<80x1xi32>
    %38 = vector.extract_strided_slice %12 {offsets = [0, 2], sizes = [80, 1], strides = [1, 1]} : vector<80x4xi32> to vector<80x1xi32>
    %39 = tpu.iota {dimensions = array<i32: 1>} : vector<80x16xi32>
    %40 = vector.broadcast %37 : vector<80x1xi32> to vector<80x16xi32>
    %41 = arith.cmpi eq, %39, %40 : vector<80x16xi32>
    %42 = vector.broadcast %38 : vector<80x1xi32> to vector<80x16xi32>
    %43 = arith.cmpi eq, %39, %42 : vector<80x16xi32>
    %44 = arith.ori %41, %43 : vector<80x16xi1>
    %45 = arith.extui %44 : vector<80x16xi1> to vector<80x16xi32>
    %46 = arith.sitofp %45 : vector<80x16xi32> to vector<80x16xf32>
    %c0_8 = arith.constant 0 : index
    %c0_9 = arith.constant 0 : index
    %47 = vector.load %arg2[%c0_8, %c0_9] : memref<16x32xf32, #tpu.memory_space<vmem>>, vector<16x32xf32>
    %cst_10 = arith.constant dense<0.000000e+00> : vector<80x32xf32>
    %48 = tpu.matmul %46, %47, %cst_10 {dimension_numbers = #tpu.dot_dimension_numbers<[1], [0], [0], [1], [0, 0, 1, 1], [], []>} : vector<80x16xf32>, vector<16x32xf32>, vector<80x32xf32> -> vector<80x32xf32>
    %49 = vector.extract_strided_slice %5 {offsets = [0, 3], sizes = [80, 1], strides = [1, 1]} : vector<80x4xi32> to vector<80x1xi32>
    %50 = vector.extract_strided_slice %12 {offsets = [0, 3], sizes = [80, 1], strides = [1, 1]} : vector<80x4xi32> to vector<80x1xi32>
    %51 = tpu.iota {dimensions = array<i32: 1>} : vector<80x16xi32>
    %52 = vector.broadcast %49 : vector<80x1xi32> to vector<80x16xi32>
    %53 = arith.cmpi eq, %51, %52 : vector<80x16xi32>
    %54 = vector.broadcast %50 : vector<80x1xi32> to vector<80x16xi32>
    %55 = arith.cmpi eq, %51, %54 : vector<80x16xi32>
    %56 = arith.ori %53, %55 : vector<80x16xi1>
    %57 = arith.extui %56 : vector<80x16xi1> to vector<80x16xi32>
    %58 = arith.sitofp %57 : vector<80x16xi32> to vector<80x16xf32>
    %c0_11 = arith.constant 0 : index
    %c0_12 = arith.constant 0 : index
    %59 = vector.load %arg2[%c0_11, %c0_12] : memref<16x32xf32, #tpu.memory_space<vmem>>, vector<16x32xf32>
    %cst_13 = arith.constant dense<0.000000e+00> : vector<80x32xf32>
    %60 = tpu.matmul %58, %59, %cst_13 {dimension_numbers = #tpu.dot_dimension_numbers<[1], [0], [0], [1], [0, 0, 1, 1], [], []>} : vector<80x16xf32>, vector<16x32xf32>, vector<80x32xf32> -> vector<80x32xf32>
    %61 = tpu.concatenate %24, %36, %48, %60 in 1 : vector<80x32xf32>, vector<80x32xf32>, vector<80x32xf32>, vector<80x32xf32> -> vector<80x128xf32>
    %c0_14 = arith.constant 0 : index
    %c0_15 = arith.constant 0 : index
    %62 = vector.load %arg3[%c0_14, %c0_15] : memref<80x128xf32, #tpu.memory_space<vmem>>, vector<80x128xf32>
    tpu.vector_store %arg3[%c0_14, %c0_15], %61 {strides = array<i32>} : memref<80x128xf32, #tpu.memory_space<vmem>>, vector<80x128xf32>,
    return
  }
  func.func @transform_0(%arg0: i32) -> (i32, i32) {
    %c0_i32 = arith.constant 0 : i32
    %c0_i32_0 = arith.constant 0 : i32
    return %arg0, %c0_i32 : i32, i32
  }
  func.func @transform_1(%arg0: i32) -> (i32, i32) {
    %c0_i32 = arith.constant 0 : i32
    %c0_i32_0 = arith.constant 0 : i32
    %c0_i32_1 = arith.constant 0 : i32
    return %c0_i32, %c0_i32_0 : i32, i32
  }
  func.func @transform_2(%arg0: i32) -> (i32, i32) {
    %c0_i32 = arith.constant 0 : i32
    %c0_i32_0 = arith.constant 0 : i32
    return %arg0, %c0_i32 : i32, i32
  }
}

</mosaic_0001>

<llo_original>
// kernel: tpu_custom_call.1
$region0: #{tpu_custom_call.1}
  #allocation0 [shape = 'u32[]', space=smem, size = 0x4, offset = 0x4, fixed_abs, tag = 'smem constant byte address 0x4 - core index']
  #allocation1 [shape = 'u32[144,128]{1,0:T(1,128)}', space=vmem, size = 0x12000, scoped, tag = 'internal scratch']
  %s0 = inlined_call_operand.vmem [shape: s32[160,8], index: 0, kind: input, shape index: {}]
  %s1 = inlined_call_operand.vmem [shape: f32[16,32], index: 1, kind: input, shape index: {}]
  %s2 = inlined_call_operand.hbm [shape: f32[160,128], index: 2, kind: output, shape index: {}]
  %s3 = sld [smem:[#allocation0]]
  $region41: #{tpu_custom_call.1} parent=0
    _
  %s5 = ssub.s32 1, %s3
  %s6 = scalar_select 0, %s5, %s3
  $region1: #{tpu_custom_call.1} parent=0
    #allocation2 [shape = 'u8[81920]{0}', space=vmem, size = 0x14000, scoped, tag = 'output window, operand 0']
    #allocation3 [shape = 's32[2]{0}', space=sflag, size = 0x8, scoped, tag = 'scoped memory for tpu_custom_call.1']
    %7 = vsyncpa [#allocation3], 0
    %s8 = scalar_lea.sflag [#allocation3], 1
    %9 = vsyncpa %s8, 0
    loop: start=0, step=1, limit=4
    $region2: #{tpu_custom_call.1} parent=1 // loop_pre_header
      _
    $region3: #{tpu_custom_call.1} parent=1 // loop_header
      %s11 = sphi 0, %s15
      %p12 = scmp.ge.s32.totalorder %s11, 4
      %s21 = sphi 0, %s23
      %s24 = sphi 0, %s21
      %s25 = sphi 0, %s24
      %s41 = sphi 0, %s25
      %s45 = sphi 0, %s45
      %s47 = sphi 0, %s45
      %s48 = sphi 0, %s47
      %s62 = sphi 0, %s48
      %s68 = sphi 0, %s70
      %s71 = sphi 0, %s68
      %s72 = sphi 0, %s71
      %s88 = sphi 0, %s72
    $region4: #{tpu_custom_call.1} parent=1 // loop_header_branch
      %14 = sbr.rel (%p12) target = $region8
    $region5: #{tpu_custom_call.1} parent=1 // loop_body
      %s16 = ssub.s32 %s11, 1
      %s17 = ssub.s32 %s11, 2
      %s18 = sadd.s32 %s11, 1
      %s19 = ssub.s32 %s11, %s18
      %p20 = scmp.eq.s32.totalorder %s19, 0
      %s22 = sadd.s32 %s21, 1
      %s23 = scalar_select %p20, %s21, %s22
      %p26 = pneg %p20
      %p27 = scmp.eq.s32.totalorder %s11, 1
      %p28 = por %p26, %p27
      %p29 = scmp.ne.s32.totalorder %s21, %s24
      %p30 = scmp.eq.s32.totalorder %s11, 0
      %p31 = por %p29, %p30
      %p32 = scmp.ne.s32.totalorder %s21, %s24
      %p33 = scmp.eq.s32.totalorder %s16, 1
      %p34 = por %p32, %p33
      %p35 = scmp.ne.s32.totalorder %s24, %s25
      %p36 = scmp.eq.s32.totalorder %s16, 0
      %p37 = por %p35, %p36
      %p38 = scmp.ne.s32.totalorder %s24, %s25
      %p39 = scmp.eq.s32.totalorder %s17, 1
      %p40 = por %p38, %p39
      %p42 = scmp.ne.s32.totalorder %s25, %s41
      %p43 = scmp.eq.s32.totalorder %s17, 0
      %p44 = por %p42, %p43
      %s46 = sadd.s32 %s45, 1
      %p49 = scmp.eq.s32.totalorder %s11, 1
      %p50 = scmp.ne.s32.totalorder %s45, %s47
      %p51 = scmp.eq.s32.totalorder %s11, 0
      %p52 = por %p50, %p51
      %p53 = scmp.ne.s32.totalorder %s45, %s47
      %p54 = scmp.eq.s32.totalorder %s16, 1
      %p55 = por %p53, %p54
      %p56 = scmp.ne.s32.totalorder %s47, %s48
      %p57 = scmp.eq.s32.totalorder %s16, 0
      %p58 = por %p56, %p57
      %p59 = scmp.ne.s32.totalorder %s47, %s48
      %p60 = scmp.eq.s32.totalorder %s17, 1
      %p61 = por %p59, %p60
      %p63 = scmp.ne.s32.totalorder %s48, %s62
      %p64 = scmp.eq.s32.totalorder %s17, 0
      %p65 = por %p63, %p64
      %s66 = ssub.s32 %s11, %s18
      %p67 = scmp.eq.s32.totalorder %s66, 0
      %s69 = sadd.s32 %s68, 1
      %s70 = scalar_select %p67, %s68, %s69
      %p73 = pneg %p67
      %p74 = scmp.eq.s32.totalorder %s11, 1
      %p75 = por %p73, %p74
      %p76 = scmp.ne.s32.totalorder %s68, %s71
      %p77 = scmp.eq.s32.totalorder %s11, 0
      %p78 = por %p76, %p77
      %p79 = scmp.ne.s32.totalorder %s68, %s71
      %p80 = scmp.eq.s32.totalorder %s16, 1
      %p81 = por %p79, %p80
      %p82 = scmp.ne.s32.totalorder %s71, %s72
      %p83 = scmp.eq.s32.totalorder %s16, 0
      %p84 = por %p82, %p83
      %p85 = scmp.ne.s32.totalorder %s71, %s72
      %p86 = scmp.eq.s32.totalorder %s17, 1
      %p87 = por %p85, %p86
      %p89 = scmp.ne.s32.totalorder %s72, %s88
      %p90 = scmp.eq.s32.totalorder %s17, 0
      %p91 = por %p89, %p90
      %p92 = scmp.le.s32.totalorder 1, %s11
      %p93 = scmp.lt.s32.totalorder %s11, 3
      %p94 = pnand %p92, %p93
      %p95 = pneg %p94
      // Predicated region
      $region9: #{tpu_custom_call.1} parent=5 // pred_check
        _
      $region10: #{tpu_custom_call.1} parent=5 // pred_check_branch
        %97 = sbr.rel (%p94) target = $region12
      $region11: #{tpu_custom_call.1} parent=5 // pred_region
        %s98 = ssub.s32 %s11, 1
        // Predicated region
        $region13: #{tpu_custom_call.1} parent=11 // pred_check
          %p99 = pneg %p58
        $region14: #{tpu_custom_call.1} parent=11 // pred_check_branch
          %101 = sbr.rel (%p99) target = $region16
        $region15: #{tpu_custom_call.1} parent=11 // pred_region
          _
        $region16: #{tpu_custom_call.1} parent=11 // pred_fallthru
          _
      $region12: #{tpu_custom_call.1} parent=5 // pred_fallthru
        _
      %p102 = scmp.lt.s32.totalorder %s11, 2
      // Predicated region
      $region17: #{tpu_custom_call.1} parent=5 // pred_check
        %p103 = pneg %p102
      $region18: #{tpu_custom_call.1} parent=5 // pred_check_branch
        %105 = sbr.rel (%p103) target = $region20
      $region19: #{tpu_custom_call.1} parent=5 // pred_region
        // Predicated region
        $region21: #{tpu_custom_call.1} parent=19 // pred_check
          %p106 = pneg %p31
        $region22: #{tpu_custom_call.1} parent=19 // pred_check_branch
          %108 = sbr.rel (%p106) target = $region24
        $region23: #{tpu_custom_call.1} parent=19 // pred_region
          %s109 = smul.u32 10, %s11
          %p110 = scmp.lt.s32.totalorder %s109, 19
          %s111 = scalar_select %p110, %s109, 19
          %s112 = smul.addr %s111, 8
          %s113 = scalar_lea.vmem %s0, %s112
          %s114 = smul.u32 10, %s11
        $region24: #{tpu_custom_call.1} parent=19 // pred_fallthru
          _
      $region20: #{tpu_custom_call.1} parent=5 // pred_fallthru
        _
      %p115 = scmp.le.s32.totalorder 1, %s11
      %p116 = scmp.lt.s32.totalorder %s11, 3
      %p117 = pnand %p115, %p116
      %p118 = pneg %p117
      // Predicated region
      $region25: #{tpu_custom_call.1} parent=5 // pred_check
        _
      $region26: #{tpu_custom_call.1} parent=5 // pred_check_branch
        %120 = sbr.rel (%p117) target = $region28
      $region27: #{tpu_custom_call.1} parent=5 // pred_region
        %s121 = ssub.s32 %s11, 1
        %s122 = smul.u32 10, %s16
        %p123 = scmp.lt.s32.totalorder %s122, 19
        %s124 = scalar_select %p123, %s122, 19
        %s125 = smul.addr %s124, 8
        %s126 = scalar_lea.vmem %s0, %s125
        %p127 = pneg %p37
        %p128 = pneg %p34
        %p129 = pneg %p58
        %p130 = pneg %p55
        %p131 = pneg %p84
        %p132 = pneg %p81
        %s133 = sand.u32 %s71, 1
        %s134 = scalar_lea.sflag [#allocation3], %s133
        %s135 = sand.u32 %s71, 1
        %s136 = smul.addr %s135, 80
        %s137 = scalar_lea.vmem [#allocation2], %s136
        %s138 = smul.u32 10, %s16
        %p139 = scmp.lt.s32.totalorder %s138, 19
        %s140 = scalar_select %p139, %s138, 19
        %s141 = smul.addr %s140, 8
        %s142 = scalar_lea.vmem %s0, %s141
        %s143 = smul.u32 10, %s16
        %s144 = smul.u32 10, %s16
        %v145 = vld [vmem:[%s142] sm:$0xff]
        %v146 = vld [vmem:[%s142 + $0x8] sm:$0xff]
        %v147 = vld [vmem:[%s142 + $0x10] sm:$0xff]
        %v148 = vld [vmem:[%s142 + $0x18] sm:$0xff]
        %v149 = vld [vmem:[%s142 + $0x20] sm:$0xff]
        %v150 = vld [vmem:[%s142 + $0x28] sm:$0xff]
        %v151 = vld [vmem:[%s142 + $0x30] sm:$0xff]
        %v152 = vld [vmem:[%s142 + $0x38] sm:$0xff]
        %v153 = vld [vmem:[%s142 + $0x40] sm:$0xff]
        %v154 = vld [vmem:[%s142 + $0x48] sm:$0xff]
        %vm155 = vcmp.gt.s32.totalorder %v145, 0
        %v156 = vsel %vm155, %v145, 0
        %vm157 = vcmp.gt.s32.totalorder %v146, 0
        %v158 = vsel %vm157, %v146, 0
        %vm159 = vcmp.gt.s32.totalorder %v147, 0
        %v160 = vsel %vm159, %v147, 0
        %vm161 = vcmp.gt.s32.totalorder %v148, 0
        %v162 = vsel %vm161, %v148, 0
        %vm163 = vcmp.gt.s32.totalorder %v149, 0
        %v164 = vsel %vm163, %v149, 0
        %vm165 = vcmp.gt.s32.totalorder %v150, 0
        %v166 = vsel %vm165, %v150, 0
        %vm167 = vcmp.gt.s32.totalorder %v151, 0
        %v168 = vsel %vm167, %v151, 0
        %vm169 = vcmp.gt.s32.totalorder %v152, 0
        %v170 = vsel %vm169, %v152, 0
        %vm171 = vcmp.gt.s32.totalorder %v153, 0
        %v172 = vsel %vm171, %v153, 0
        %vm173 = vcmp.gt.s32.totalorder %v154, 0
        %v174 = vsel %vm173, %v154, 0
        %vm175 = vcmp.lt.s32.totalorder %v156, 5
        %v176 = vsel %vm175, %v156, 5
        %vm177 = vcmp.lt.s32.totalorder %v158, 5
        %v178 = vsel %vm177, %v158, 5
        %vm179 = vcmp.lt.s32.totalorder %v160, 5
        %v180 = vsel %vm179, %v160, 5
        %vm181 = vcmp.lt.s32.totalorder %v162, 5
        %v182 = vsel %vm181, %v162, 5
        %vm183 = vcmp.lt.s32.totalorder %v164, 5
        %v184 = vsel %vm183, %v164, 5
        %vm185 = vcmp.lt.s32.totalorder %v166, 5
        %v186 = vsel %vm185, %v166, 5
        %vm187 = vcmp.lt.s32.totalorder %v168, 5
        %v188 = vsel %vm187, %v168, 5
        %vm189 = vcmp.lt.s32.totalorder %v170, 5
        %v190 = vsel %vm189, %v170, 5
        %vm191 = vcmp.lt.s32.totalorder %v172, 5
        %v192 = vsel %vm191, %v172, 5
        %vm193 = vcmp.lt.s32.totalorder %v174, 5
        %v194 = vsel %vm193, %v174, 5
        %v195 = vadd.s32 %v176, 6
        %v196 = vadd.s32 %v178, 6
        %v197 = vadd.s32 %v180, 6
        %v198 = vadd.s32 %v182, 6
        %v199 = vadd.s32 %v184, 6
        %v200 = vadd.s32 %v186, 6
        %v201 = vadd.s32 %v188, 6
        %v202 = vadd.s32 %v190, 6
        %v203 = vadd.s32 %v192, 6
        %v204 = vadd.s32 %v194, 6
        %v205 = vlaneseq
        %v206 = vand.u32 %v205, 127
        %207 = vset.pattern.permute.xlu0 0
        %208 = vperm.xlu0 %207, %v176
        %v209 = vpop.permute.xlu0 %208
        %210 = vset.pattern.permute.xlu0 0
        %211 = vperm.xlu0 %210, %v178
        %v212 = vpop.permute.xlu0 %211
        %213 = vset.pattern.permute.xlu0 0
        %214 = vperm.xlu0 %213, %v180
        %v215 = vpop.permute.xlu0 %214
        %216 = vset.pattern.permute.xlu0 0
        %217 = vperm.xlu0 %216, %v182
        %v218 = vpop.permute.xlu0 %217
        %219 = vset.pattern.permute.xlu0 0
        %220 = vperm.xlu0 %219, %v184
        %v221 = vpop.permute.xlu0 %220
        %222 = vset.pattern.permute.xlu0 0
        %223 = vperm.xlu0 %222, %v186
        %v224 = vpop.permute.xlu0 %223
        %225 = vset.pattern.permute.xlu0 0
        %226 = vperm.xlu0 %225, %v188
        %v227 = vpop.permute.xlu0 %226
        %228 = vset.pattern.permute.xlu0 0
        %229 = vperm.xlu0 %228, %v190
        %v230 = vpop.permute.xlu0 %229
        %231 = vset.pattern.permute.xlu0 0
        %232 = vperm.xlu0 %231, %v192
        %v233 = vpop.permute.xlu0 %232
        %234 = vset.pattern.permute.xlu0 0
        %235 = vperm.xlu0 %234, %v194
        %v236 = vpop.permute.xlu0 %235
        %vm237 = vcmp.eq.s32.totalorder %v206, %v209
        %vm238 = vcmp.eq.s32.totalorder %v206, %v212
        %vm239 = vcmp.eq.s32.totalorder %v206, %v215
        %vm240 = vcmp.eq.s32.totalorder %v206, %v218
        %vm241 = vcmp.eq.s32.totalorder %v206, %v221
        %vm242 = vcmp.eq.s32.totalorder %v206, %v224
        %vm243 = vcmp.eq.s32.totalorder %v206, %v227
        %vm244 = vcmp.eq.s32.totalorder %v206, %v230
        %vm245 = vcmp.eq.s32.totalorder %v206, %v233
        %vm246 = vcmp.eq.s32.totalorder %v206, %v236
        %247 = vset.pattern.permute.xlu0 4
        %248 = vperm.xlu0 %247, %v195
        %v249 = vpop.permute.xlu0 %248
        %250 = vset.pattern.permute.xlu0 4
        %251 = vperm.xlu0 %250, %v196
        %v252 = vpop.permute.xlu0 %251
        %253 = vset.pattern.permute.xlu0 4
        %254 = vperm.xlu0 %253, %v197
        %v255 = vpop.permute.xlu0 %254
        %256 = vset.pattern.permute.xlu0 4
        %257 = vperm.xlu0 %256, %v198
        %v258 = vpop.permute.xlu0 %257
        %259 = vset.pattern.permute.xlu0 4
        %260 = vperm.xlu0 %259, %v199
        %v261 = vpop.permute.xlu0 %260
        %262 = vset.pattern.permute.xlu0 4
        %263 = vperm.xlu0 %262, %v200
        %v264 = vpop.permute.xlu0 %263
        %265 = vset.pattern.permute.xlu0 4
        %266 = vperm.xlu0 %265, %v201
        %v267 = vpop.permute.xlu0 %266
        %268 = vset.pattern.permute.xlu0 4
        %269 = vperm.xlu0 %268, %v202
        %v270 = vpop.permute.xlu0 %269
        %271 = vset.pattern.permute.xlu0 4
        %272 = vperm.xlu0 %271, %v203
        %v273 = vpop.permute.xlu0 %272
        %274 = vset.pattern.permute.xlu0 4
        %275 = vperm.xlu0 %274, %v204
        %v276 = vpop.permute.xlu0 %275
        %vm277 = vcmp.eq.s32.totalorder %v206, %v249
        %vm278 = vcmp.eq.s32.totalorder %v206, %v252
        %vm279 = vcmp.eq.s32.totalorder %v206, %v255
        %vm280 = vcmp.eq.s32.totalorder %v206, %v258
        %vm281 = vcmp.eq.s32.totalorder %v206, %v261
        %vm282 = vcmp.eq.s32.totalorder %v206, %v264
        %vm283 = vcmp.eq.s32.totalorder %v206, %v267
        %vm284 = vcmp.eq.s32.totalorder %v206, %v270
        %vm285 = vcmp.eq.s32.totalorder %v206, %v273
        %vm286 = vcmp.eq.s32.totalorder %v206, %v276
        %vm287 = vmor %vm237, %vm277
        %vm288 = vmor %vm238, %vm278
        %vm289 = vmor %vm239, %vm279
        %vm290 = vmor %vm240, %vm280
        %vm291 = vmor %vm241, %vm281
        %vm292 = vmor %vm242, %vm282
        %vm293 = vmor %vm243, %vm283
        %vm294 = vmor %vm244, %vm284
        %vm295 = vmor %vm245, %vm285
        %vm296 = vmor %vm246, %vm286
        %v297 = vsel %vm287, 1, 0
        %v298 = vsel %vm288, 1, 0
        %v299 = vsel %vm289, 1, 0
        %v300 = vsel %vm290, 1, 0
        %v301 = vsel %vm291, 1, 0
        %v302 = vsel %vm292, 1, 0
        %v303 = vsel %vm293, 1, 0
        %v304 = vsel %vm294, 1, 0
        %v305 = vsel %vm295, 1, 0
        %v306 = vsel %vm296, 1, 0
        %v307 = vcvt.s32.f32 %v297
        %v308 = vcvt.s32.f32 %v298
        %v309 = vcvt.s32.f32 %v299
        %v310 = vcvt.s32.f32 %v300
        %v311 = vcvt.s32.f32 %v301
        %v312 = vcvt.s32.f32 %v302
        %v313 = vcvt.s32.f32 %v303
        %v314 = vcvt.s32.f32 %v304
        %v315 = vcvt.s32.f32 %v305
        %v316 = vcvt.s32.f32 %v306
        %v317 = vld [vmem:[%s1] sm:$0xff]
        %v318 = vld [vmem:[%s1 + $0x8] sm:$0xff]
        %vm319 = vcmask 130048
        %v321 = vsel %vm319, %v307, 0
        %v324 = vsel %vm319, %v308, 0
        %v327 = vsel %vm319, %v309, 0
        %v330 = vsel %vm319, %v310, 0
        %v333 = vsel %vm319, %v311, 0
        %v336 = vsel %vm319, %v312, 0
        %v339 = vsel %vm319, %v313, 0
        %v342 = vsel %vm319, %v314, 0
        %v345 = vsel %vm319, %v315, 0
        %v348 = vsel %vm319, %v316, 0
        %350 = vmatprep.subr.mxu0 0.0
        %351 = vmatpush1.msra.mxu0 0.0
        %352 = vmatprep.subr.mxu0 0.0
        %353 = vmatpush1.msra.mxu0 0.0
        %354 = vmatprep.subr.mxu0 0.0
        %355 = vmatpush1.msra.mxu0 0.0
        %356 = vmatprep.subr.mxu0 0.0
        %357 = vmatpush1.msra.mxu0 0.0
        %358 = vmatprep.subr.mxu0 0.0
        %359 = vmatpush1.msra.mxu0 0.0
        %360 = vmatprep.subr.mxu0 0.0
        %361 = vmatpush1.msra.mxu0 0.0
        %362 = vmatprep.subr.mxu0 0.0
        %363 = vmatpush1.msra.mxu0 0.0
        %364 = vmatprep.subr.mxu0 0.0
        %365 = vmatpush1.msra.mxu0 0.0
        %366 = vmatprep.subr.mxu0 0.0
        %367 = vmatpush1.msra.mxu0 0.0
        %368 = vmatprep.subr.mxu0 0.0
        %369 = vmatpush1.msra.mxu0 0.0
        %370 = vmatprep.subr.mxu0 0.0
        %371 = vmatpush1.msra.mxu0 0.0
        %372 = vmatprep.subr.mxu0 0.0
        %373 = vmatpush1.msra.mxu0 0.0
        %374 = vmatprep.subr.mxu0 0.0
        %375 = vmatpush1.msra.mxu0 0.0
        %376 = vmatprep.subr.mxu0 0.0
        %377 = vmatpush1.msra.mxu0 0.0
        %378 = vmatprep.subr.mxu0 0.0
        %379 = vmatpush1.msra.mxu0 %v318
        %380 = vmatprep.subr.mxu0 0.0
        %381 = vmatpush1.msra.mxu0 %v317
        %382 = vmatprep.subr.mxu0 0.0
        %383 = vmatpush2.msra.mxu0 0.0
        %384 = vmatprep.subr.mxu0 0.0
        %385 = vmatpush2.msra.mxu0 0.0
        %386 = vmatprep.subr.mxu0 0.0
        %387 = vmatpush2.msra.mxu0 0.0
        %388 = vmatprep.subr.mxu0 0.0
        %389 = vmatpush2.msra.mxu0 0.0
        %390 = vmatprep.subr.mxu0 0.0
        %391 = vmatpush2.msra.mxu0 0.0
        %392 = vmatprep.subr.mxu0 0.0
        %393 = vmatpush2.msra.mxu0 0.0
        %394 = vmatprep.subr.mxu0 0.0
        %395 = vmatpush2.msra.mxu0 0.0
        %396 = vmatprep.subr.mxu0 0.0
        %397 = vmatpush2.msra.mxu0 0.0
        %398 = vmatprep.subr.mxu0 0.0
        %399 = vmatpush2.msra.mxu0 0.0
        %400 = vmatprep.subr.mxu0 0.0
        %401 = vmatpush2.msra.mxu0 0.0
        %402 = vmatprep.subr.mxu0 0.0
        %403 = vmatpush2.msra.mxu0 0.0
        %404 = vmatprep.subr.mxu0 0.0
        %405 = vmatpush2.msra.mxu0 0.0
        %406 = vmatprep.subr.mxu0 0.0
        %407 = vmatpush2.msra.mxu0 0.0
        %408 = vmatprep.subr.mxu0 0.0
        %409 = vmatpush2.msra.mxu0 0.0
        %410 = vmatprep.subr.mxu0 0.0
        %411 = vmatpush2.msra.mxu0 0.0
        %412 = vmatprep.subr.mxu0 0.0
        %413 = vmatpush2.msra.mxu0 0.0
        %414 = vmatprep.mubr.f32.mxu0 0.0
        %415 = vmatmul.mubr.f32.gmra.mxu0 %v321
        %v416 = vpop.f32.mrf.mxu0
        %v417 = vadd.f32 0.0, %v416
        %v418 = vpop.f32.mrf.mxu0
        %419 = vmatprep.mubr.f32.mxu0 0.0
        %420 = vmatmul.mubr.f32.gmra.mxu0 %v324
        %v421 = vpop.f32.mrf.mxu0
        %v422 = vadd.f32 0.0, %v421
        %v423 = vpop.f32.mrf.mxu0
        %424 = vmatprep.mubr.f32.mxu0 0.0
        %425 = vmatmul.mubr.f32.gmra.mxu0 %v327
        %v426 = vpop.f32.mrf.mxu0
        %v427 = vadd.f32 0.0, %v426
        %v428 = vpop.f32.mrf.mxu0
        %429 = vmatprep.mubr.f32.mxu0 0.0
        %430 = vmatmul.mubr.f32.gmra.mxu0 %v330
        %v431 = vpop.f32.mrf.mxu0
        %v432 = vadd.f32 0.0, %v431
        %v433 = vpop.f32.mrf.mxu0
        %434 = vmatprep.mubr.f32.mxu0 0.0
        %435 = vmatmul.mubr.f32.gmra.mxu0 %v333
        %v436 = vpop.f32.mrf.mxu0
        %v437 = vadd.f32 0.0, %v436
        %v438 = vpop.f32.mrf.mxu0
        %439 = vmatprep.mubr.f32.mxu0 0.0
        %440 = vmatmul.mubr.f32.gmra.mxu0 %v336
        %v441 = vpop.f32.mrf.mxu0
        %v442 = vadd.f32 0.0, %v441
        %v443 = vpop.f32.mrf.mxu0
        %444 = vmatprep.mubr.f32.mxu0 0.0
        %445 = vmatmul.mubr.f32.gmra.mxu0 %v339
        %v446 = vpop.f32.mrf.mxu0
        %v447 = vadd.f32 0.0, %v446
        %v448 = vpop.f32.mrf.mxu0
        %449 = vmatprep.mubr.f32.mxu0 0.0
        %450 = vmatmul.mubr.f32.gmra.mxu0 %v342
        %v451 = vpop.f32.mrf.mxu0
        %v452 = vadd.f32 0.0, %v451
        %v453 = vpop.f32.mrf.mxu0
        %454 = vmatprep.mubr.f32.mxu0 0.0
        %455 = vmatmul.mubr.f32.gmra.mxu0 %v345
        %v456 = vpop.f32.mrf.mxu0
        %v457 = vadd.f32 0.0, %v456
        %v458 = vpop.f32.mrf.mxu0
        %459 = vmatprep.mubr.f32.mxu0 0.0
        %460 = vmatmul.mubr.f32.gmra.mxu0 %v348
        %v461 = vpop.f32.mrf.mxu0
        %v462 = vadd.f32 0.0, %v461
        %v463 = vpop.f32.mrf.mxu0
        %464 = vdwg.mxu0
        %465 = vset.pattern.permute.xlu0 1
        %466 = vperm.xlu0 %465, %v176
        %v467 = vpop.permute.xlu0 %466
        %468 = vset.pattern.permute.xlu0 1
        %469 = vperm.xlu0 %468, %v178
        %v470 = vpop.permute.xlu0 %469
        %471 = vset.pattern.permute.xlu0 1
        %472 = vperm.xlu0 %471, %v180
        %v473 = vpop.permute.xlu0 %472
        %474 = vset.pattern.permute.xlu0 1
        %475 = vperm.xlu0 %474, %v182
        %v476 = vpop.permute.xlu0 %475
        %477 = vset.pattern.permute.xlu0 1
        %478 = vperm.xlu0 %477, %v184
        %v479 = vpop.permute.xlu0 %478
        %480 = vset.pattern.permute.xlu0 1
        %481 = vperm.xlu0 %480, %v186
        %v482 = vpop.permute.xlu0 %481
        %483 = vset.pattern.permute.xlu0 1
        %484 = vperm.xlu0 %483, %v188
        %v485 = vpop.permute.xlu0 %484
        %486 = vset.pattern.permute.xlu0 1
        %487 = vperm.xlu0 %486, %v190
        %v488 = vpop.permute.xlu0 %487
        %489 = vset.pattern.permute.xlu0 1
        %490 = vperm.xlu0 %489, %v192
        %v491 = vpop.permute.xlu0 %490
        %492 = vset.pattern.permute.xlu0 1
        %493 = vperm.xlu0 %492, %v194
        %v494 = vpop.permute.xlu0 %493
        %vm495 = vcmp.eq.s32.totalorder %v206, %v467
        %vm496 = vcmp.eq.s32.totalorder %v206, %v470
        %vm497 = vcmp.eq.s32.totalorder %v206, %v473
        %vm498 = vcmp.eq.s32.totalorder %v206, %v476
        %vm499 = vcmp.eq.s32.totalorder %v206, %v479
        %vm500 = vcmp.eq.s32.totalorder %v206, %v482
        %vm501 = vcmp.eq.s32.totalorder %v206, %v485
        %vm502 = vcmp.eq.s32.totalorder %v206, %v488
        %vm503 = vcmp.eq.s32.totalorder %v206, %v491
        %vm504 = vcmp.eq.s32.totalorder %v206, %v494
        %505 = vset.pattern.permute.xlu0 5
        %506 = vperm.xlu0 %505, %v195
        %v507 = vpop.permute.xlu0 %506
        %508 = vset.pattern.permute.xlu0 5
        %509 = vperm.xlu0 %508, %v196
        %v510 = vpop.permute.xlu0 %509
        %511 = vset.pattern.permute.xlu0 5
        %512 = vperm.xlu0 %511, %v197
        %v513 = vpop.permute.xlu0 %512
        %514 = vset.pattern.permute.xlu0 5
        %515 = vperm.xlu0 %514, %v198
        %v516 = vpop.permute.xlu0 %515
        %517 = vset.pattern.permute.xlu0 5
        %518 = vperm.xlu0 %517, %v199
        %v519 = vpop.permute.xlu0 %518
        %520 = vset.pattern.permute.xlu0 5
        %521 = vperm.xlu0 %520, %v200
        %v522 = vpop.permute.xlu0 %521
        %523 = vset.pattern.permute.xlu0 5
        %524 = vperm.xlu0 %523, %v201
        %v525 = vpop.permute.xlu0 %524
        %526 = vset.pattern.permute.xlu0 5
        %527 = vperm.xlu0 %526, %v202
        %v528 = vpop.permute.xlu0 %527
        %529 = vset.pattern.permute.xlu0 5
        %530 = vperm.xlu0 %529, %v203
        %v531 = vpop.permute.xlu0 %530
        %532 = vset.pattern.permute.xlu0 5
        %533 = vperm.xlu0 %532, %v204
        %v534 = vpop.permute.xlu0 %533
        %vm535 = vcmp.eq.s32.totalorder %v206, %v507
        %vm536 = vcmp.eq.s32.totalorder %v206, %v510
        %vm537 = vcmp.eq.s32.totalorder %v206, %v513
        %vm538 = vcmp.eq.s32.totalorder %v206, %v516
        %vm539 = vcmp.eq.s32.totalorder %v206, %v519
        %vm540 = vcmp.eq.s32.totalorder %v206, %v522
        %vm541 = vcmp.eq.s32.totalorder %v206, %v525
        %vm542 = vcmp.eq.s32.totalorder %v206, %v528
        %vm543 = vcmp.eq.s32.totalorder %v206, %v531
        %vm544 = vcmp.eq.s32.totalorder %v206, %v534
        %vm545 = vmor %vm495, %vm535
        %vm546 = vmor %vm496, %vm536
        %vm547 = vmor %vm497, %vm537
        %vm548 = vmor %vm498, %vm538
        %vm549 = vmor %vm499, %vm539
        %vm550 = vmor %vm500, %vm540
        %vm551 = vmor %vm501, %vm541
        %vm552 = vmor %vm502, %vm542
        %vm553 = vmor %vm503, %vm543
        %vm554 = vmor %vm504, %vm544
        %v555 = vsel %vm545, 1, 0
        %v556 = vsel %vm546, 1, 0
        %v557 = vsel %vm547, 1, 0
        %v558 = vsel %vm548, 1, 0
        %v559 = vsel %vm549, 1, 0
        %v560 = vsel %vm550, 1, 0
        %v561 = vsel %vm551, 1, 0
        %v562 = vsel %vm552, 1, 0
        %v563 = vsel %vm553, 1, 0
        %v564 = vsel %vm554, 1, 0
        %v565 = vcvt.s32.f32 %v555
        %v566 = vcvt.s32.f32 %v556
        %v567 = vcvt.s32.f32 %v557
        %v568 = vcvt.s32.f32 %v558
        %v569 = vcvt.s32.f32 %v559
        %v570 = vcvt.s32.f32 %v560
        %v571 = vcvt.s32.f32 %v561
        %v572 = vcvt.s32.f32 %v562
        %v573 = vcvt.s32.f32 %v563
        %v574 = vcvt.s32.f32 %v564
        %v576 = vsel %vm319, %v565, 0
        %v579 = vsel %vm319, %v566, 0
        %v582 = vsel %vm319, %v567, 0
        %v585 = vsel %vm319, %v568, 0
        %v588 = vsel %vm319, %v569, 0
        %v591 = vsel %vm319, %v570, 0
        %v594 = vsel %vm319, %v571, 0
        %v597 = vsel %vm319, %v572, 0
        %v600 = vsel %vm319, %v573, 0
        %v603 = vsel %vm319, %v574, 0
        %605 = vmatprep.subr.mxu0 0.0
        %606 = vmatpush1.msra.mxu0 0.0
        %607 = vmatprep.subr.mxu0 0.0
        %608 = vmatpush1.msra.mxu0 0.0
        %609 = vmatprep.subr.mxu0 0.0
        %610 = vmatpush1.msra.mxu0 0.0
        %611 = vmatprep.subr.mxu0 0.0
        %612 = vmatpush1.msra.mxu0 0.0
        %613 = vmatprep.subr.mxu0 0.0
        %614 = vmatpush1.msra.mxu0 0.0
        %615 = vmatprep.subr.mxu0 0.0
        %616 = vmatpush1.msra.mxu0 0.0
        %617 = vmatprep.subr.mxu0 0.0
        %618 = vmatpush1.msra.mxu0 0.0
        %619 = vmatprep.subr.mxu0 0.0
        %620 = vmatpush1.msra.mxu0 0.0
        %621 = vmatprep.subr.mxu0 0.0
        %622 = vmatpush1.msra.mxu0 0.0
        %623 = vmatprep.subr.mxu0 0.0
        %624 = vmatpush1.msra.mxu0 0.0
        %625 = vmatprep.subr.mxu0 0.0
        %626 = vmatpush1.msra.mxu0 0.0
        %627 = vmatprep.subr.mxu0 0.0
        %628 = vmatpush1.msra.mxu0 0.0
        %629 = vmatprep.subr.mxu0 0.0
        %630 = vmatpush1.msra.mxu0 0.0
        %631 = vmatprep.subr.mxu0 0.0
        %632 = vmatpush1.msra.mxu0 0.0
        %633 = vmatprep.subr.mxu0 0.0
        %634 = vmatpush1.msra.mxu0 %v318
        %635 = vmatprep.subr.mxu0 0.0
        %636 = vmatpush1.msra.mxu0 %v317
        %637 = vmatprep.subr.mxu0 0.0
        %638 = vmatpush2.msra.mxu0 0.0
        %639 = vmatprep.subr.mxu0 0.0
        %640 = vmatpush2.msra.mxu0 0.0
        %641 = vmatprep.subr.mxu0 0.0
        %642 = vmatpush2.msra.mxu0 0.0
        %643 = vmatprep.subr.mxu0 0.0
        %644 = vmatpush2.msra.mxu0 0.0
        %645 = vmatprep.subr.mxu0 0.0
        %646 = vmatpush2.msra.mxu0 0.0
        %647 = vmatprep.subr.mxu0 0.0
        %648 = vmatpush2.msra.mxu0 0.0
        %649 = vmatprep.subr.mxu0 0.0
        %650 = vmatpush2.msra.mxu0 0.0
        %651 = vmatprep.subr.mxu0 0.0
        %652 = vmatpush2.msra.mxu0 0.0
        %653 = vmatprep.subr.mxu0 0.0
        %654 = vmatpush2.msra.mxu0 0.0
        %655 = vmatprep.subr.mxu0 0.0
        %656 = vmatpush2.msra.mxu0 0.0
        %657 = vmatprep.subr.mxu0 0.0
        %658 = vmatpush2.msra.mxu0 0.0
        %659 = vmatprep.subr.mxu0 0.0
        %660 = vmatpush2.msra.mxu0 0.0
        %661 = vmatprep.subr.mxu0 0.0
        %662 = vmatpush2.msra.mxu0 0.0
        %663 = vmatprep.subr.mxu0 0.0
        %664 = vmatpush2.msra.mxu0 0.0
        %665 = vmatprep.subr.mxu0 0.0
        %666 = vmatpush2.msra.mxu0 0.0
        %667 = vmatprep.subr.mxu0 0.0
        %668 = vmatpush2.msra.mxu0 0.0
        %669 = vmatprep.mubr.f32.mxu0 0.0
        %670 = vmatmul.mubr.f32.gmra.mxu0 %v576
        %v671 = vpop.f32.mrf.mxu0
        %v672 = vadd.f32 0.0, %v671
        %v673 = vpop.f32.mrf.mxu0
        %674 = vmatprep.mubr.f32.mxu0 0.0
        %675 = vmatmul.mubr.f32.gmra.mxu0 %v579
        %v676 = vpop.f32.mrf.mxu0
        %v677 = vadd.f32 0.0, %v676
        %v678 = vpop.f32.mrf.mxu0
        %679 = vmatprep.mubr.f32.mxu0 0.0
        %680 = vmatmul.mubr.f32.gmra.mxu0 %v582
        %v681 = vpop.f32.mrf.mxu0
        %v682 = vadd.f32 0.0, %v681
        %v683 = vpop.f32.mrf.mxu0
        %684 = vmatprep.mubr.f32.mxu0 0.0
        %685 = vmatmul.mubr.f32.gmra.mxu0 %v585
        %v686 = vpop.f32.mrf.mxu0
        %v687 = vadd.f32 0.0, %v686
        %v688 = vpop.f32.mrf.mxu0
        %689 = vmatprep.mubr.f32.mxu0 0.0
        %690 = vmatmul.mubr.f32.gmra.mxu0 %v588
        %v691 = vpop.f32.mrf.mxu0
        %v692 = vadd.f32 0.0, %v691
        %v693 = vpop.f32.mrf.mxu0
        %694 = vmatprep.mubr.f32.mxu0 0.0
        %695 = vmatmul.mubr.f32.gmra.mxu0 %v591
        %v696 = vpop.f32.mrf.mxu0
        %v697 = vadd.f32 0.0, %v696
        %v698 = vpop.f32.mrf.mxu0
        %699 = vmatprep.mubr.f32.mxu0 0.0
        %700 = vmatmul.mubr.f32.gmra.mxu0 %v594
        %v701 = vpop.f32.mrf.mxu0
        %v702 = vadd.f32 0.0, %v701
        %v703 = vpop.f32.mrf.mxu0
        %704 = vmatprep.mubr.f32.mxu0 0.0
        %705 = vmatmul.mubr.f32.gmra.mxu0 %v597
        %v706 = vpop.f32.mrf.mxu0
        %v707 = vadd.f32 0.0, %v706
        %v708 = vpop.f32.mrf.mxu0
        %709 = vmatprep.mubr.f32.mxu0 0.0
        %710 = vmatmul.mubr.f32.gmra.mxu0 %v600
        %v711 = vpop.f32.mrf.mxu0
        %v712 = vadd.f32 0.0, %v711
        %v713 = vpop.f32.mrf.mxu0
        %714 = vmatprep.mubr.f32.mxu0 0.0
        %715 = vmatmul.mubr.f32.gmra.mxu0 %v603
        %v716 = vpop.f32.mrf.mxu0
        %v717 = vadd.f32 0.0, %v716
        %v718 = vpop.f32.mrf.mxu0
        %719 = vdwg.mxu0
        %720 = vset.pattern.permute.xlu0 2
        %721 = vperm.xlu0 %720, %v176
        %v722 = vpop.permute.xlu0 %721
        %723 = vset.pattern.permute.xlu0 2
        %724 = vperm.xlu0 %723, %v178
        %v725 = vpop.permute.xlu0 %724
        %726 = vset.pattern.permute.xlu0 2
        %727 = vperm.xlu0 %726, %v180
        %v728 = vpop.permute.xlu0 %727
        %729 = vset.pattern.permute.xlu0 2
        %730 = vperm.xlu0 %729, %v182
        %v731 = vpop.permute.xlu0 %730
        %732 = vset.pattern.permute.xlu0 2
        %733 = vperm.xlu0 %732, %v184
        %v734 = vpop.permute.xlu0 %733
        %735 = vset.pattern.permute.xlu0 2
        %736 = vperm.xlu0 %735, %v186
        %v737 = vpop.permute.xlu0 %736
        %738 = vset.pattern.permute.xlu0 2
        %739 = vperm.xlu0 %738, %v188
        %v740 = vpop.permute.xlu0 %739
        %741 = vset.pattern.permute.xlu0 2
        %742 = vperm.xlu0 %741, %v190
        %v743 = vpop.permute.xlu0 %742
        %744 = vset.pattern.permute.xlu0 2
        %745 = vperm.xlu0 %744, %v192
        %v746 = vpop.permute.xlu0 %745
        %747 = vset.pattern.permute.xlu0 2
        %748 = vperm.xlu0 %747, %v194
        %v749 = vpop.permute.xlu0 %748
        %vm750 = vcmp.eq.s32.totalorder %v206, %v722
        %vm751 = vcmp.eq.s32.totalorder %v206, %v725
        %vm752 = vcmp.eq.s32.totalorder %v206, %v728
        %vm753 = vcmp.eq.s32.totalorder %v206, %v731
        %vm754 = vcmp.eq.s32.totalorder %v206, %v734
        %vm755 = vcmp.eq.s32.totalorder %v206, %v737
        %vm756 = vcmp.eq.s32.totalorder %v206, %v740
        %vm757 = vcmp.eq.s32.totalorder %v206, %v743
        %vm758 = vcmp.eq.s32.totalorder %v206, %v746
        %vm759 = vcmp.eq.s32.totalorder %v206, %v749
        %760 = vset.pattern.permute.xlu0 6
        %761 = vperm.xlu0 %760, %v195
        %v762 = vpop.permute.xlu0 %761
        %763 = vset.pattern.permute.xlu0 6
        %764 = vperm.xlu0 %763, %v196
        %v765 = vpop.permute.xlu0 %764
        %766 = vset.pattern.permute.xlu0 6
        %767 = vperm.xlu0 %766, %v197
        %v768 = vpop.permute.xlu0 %767
        %769 = vset.pattern.permute.xlu0 6
        %770 = vperm.xlu0 %769, %v198
        %v771 = vpop.permute.xlu0 %770
        %772 = vset.pattern.permute.xlu0 6
        %773 = vperm.xlu0 %772, %v199
        %v774 = vpop.permute.xlu0 %773
        %775 = vset.pattern.permute.xlu0 6
        %776 = vperm.xlu0 %775, %v200
        %v777 = vpop.permute.xlu0 %776
        %778 = vset.pattern.permute.xlu0 6
        %779 = vperm.xlu0 %778, %v201
        %v780 = vpop.permute.xlu0 %779
        %781 = vset.pattern.permute.xlu0 6
        %782 = vperm.xlu0 %781, %v202
        %v783 = vpop.permute.xlu0 %782
        %784 = vset.pattern.permute.xlu0 6
        %785 = vperm.xlu0 %784, %v203
        %v786 = vpop.permute.xlu0 %785
        %787 = vset.pattern.permute.xlu0 6
        %788 = vperm.xlu0 %787, %v204
        %v789 = vpop.permute.xlu0 %788
        %vm790 = vcmp.eq.s32.totalorder %v206, %v762
        %vm791 = vcmp.eq.s32.totalorder %v206, %v765
        %vm792 = vcmp.eq.s32.totalorder %v206, %v768
        %vm793 = vcmp.eq.s32.totalorder %v206, %v771
        %vm794 = vcmp.eq.s32.totalorder %v206, %v774
        %vm795 = vcmp.eq.s32.totalorder %v206, %v777
        %vm796 = vcmp.eq.s32.totalorder %v206, %v780
        %vm797 = vcmp.eq.s32.totalorder %v206, %v783
        %vm798 = vcmp.eq.s32.totalorder %v206, %v786
        %vm799 = vcmp.eq.s32.totalorder %v206, %v789
        %vm800 = vmor %vm750, %vm790
        %vm801 = vmor %vm751, %vm791
        %vm802 = vmor %vm752, %vm792
        %vm803 = vmor %vm753, %vm793
        %vm804 = vmor %vm754, %vm794
        %vm805 = vmor %vm755, %vm795
        %vm806 = vmor %vm756, %vm796
        %vm807 = vmor %vm757, %vm797
        %vm808 = vmor %vm758, %vm798
        %vm809 = vmor %vm759, %vm799
        %v810 = vsel %vm800, 1, 0
        %v811 = vsel %vm801, 1, 0
        %v812 = vsel %vm802, 1, 0
        %v813 = vsel %vm803, 1, 0
        %v814 = vsel %vm804, 1, 0
        %v815 = vsel %vm805, 1, 0
        %v816 = vsel %vm806, 1, 0
        %v817 = vsel %vm807, 1, 0
        %v818 = vsel %vm808, 1, 0
        %v819 = vsel %vm809, 1, 0
        %v820 = vcvt.s32.f32 %v810
        %v821 = vcvt.s32.f32 %v811
        %v822 = vcvt.s32.f32 %v812
        %v823 = vcvt.s32.f32 %v813
        %v824 = vcvt.s32.f32 %v814
        %v825 = vcvt.s32.f32 %v815
        %v826 = vcvt.s32.f32 %v816
        %v827 = vcvt.s32.f32 %v817
        %v828 = vcvt.s32.f32 %v818
        %v829 = vcvt.s32.f32 %v819
        %v831 = vsel %vm319, %v820, 0
        %v834 = vsel %vm319, %v821, 0
        %v837 = vsel %vm319, %v822, 0
        %v840 = vsel %vm319, %v823, 0
        %v843 = vsel %vm319, %v824, 0
        %v846 = vsel %vm319, %v825, 0
        %v849 = vsel %vm319, %v826, 0
        %v852 = vsel %vm319, %v827, 0
        %v855 = vsel %vm319, %v828, 0
        %v858 = vsel %vm319, %v829, 0
        %860 = vmatprep.subr.mxu0 0.0
        %861 = vmatpush1.msra.mxu0 0.0
        %862 = vmatprep.subr.mxu0 0.0
        %863 = vmatpush1.msra.mxu0 0.0
        %864 = vmatprep.subr.mxu0 0.0
        %865 = vmatpush1.msra.mxu0 0.0
        %866 = vmatprep.subr.mxu0 0.0
        %867 = vmatpush1.msra.mxu0 0.0
        %868 = vmatprep.subr.mxu0 0.0
        %869 = vmatpush1.msra.mxu0 0.0
        %870 = vmatprep.subr.mxu0 0.0
        %871 = vmatpush1.msra.mxu0 0.0
        %872 = vmatprep.subr.mxu0 0.0
        %873 = vmatpush1.msra.mxu0 0.0
        %874 = vmatprep.subr.mxu0 0.0
        %875 = vmatpush1.msra.mxu0 0.0
        %876 = vmatprep.subr.mxu0 0.0
        %877 = vmatpush1.msra.mxu0 0.0
        %878 = vmatprep.subr.mxu0 0.0
        %879 = vmatpush1.msra.mxu0 0.0
        %880 = vmatprep.subr.mxu0 0.0
        %881 = vmatpush1.msra.mxu0 0.0
        %882 = vmatprep.subr.mxu0 0.0
        %883 = vmatpush1.msra.mxu0 0.0
        %884 = vmatprep.subr.mxu0 0.0
        %885 = vmatpush1.msra.mxu0 0.0
        %886 = vmatprep.subr.mxu0 0.0
        %887 = vmatpush1.msra.mxu0 0.0
        %888 = vmatprep.subr.mxu0 0.0
        %889 = vmatpush1.msra.mxu0 %v318
        %890 = vmatprep.subr.mxu0 0.0
        %891 = vmatpush1.msra.mxu0 %v317
        %892 = vmatprep.subr.mxu0 0.0
        %893 = vmatpush2.msra.mxu0 0.0
        %894 = vmatprep.subr.mxu0 0.0
        %895 = vmatpush2.msra.mxu0 0.0
        %896 = vmatprep.subr.mxu0 0.0
        %897 = vmatpush2.msra.mxu0 0.0
        %898 = vmatprep.subr.mxu0 0.0
        %899 = vmatpush2.msra.mxu0 0.0
        %900 = vmatprep.subr.mxu0 0.0
        %901 = vmatpush2.msra.mxu0 0.0
        %902 = vmatprep.subr.mxu0 0.0
        %903 = vmatpush2.msra.mxu0 0.0
        %904 = vmatprep.subr.mxu0 0.0
        %905 = vmatpush2.msra.mxu0 0.0
        %906 = vmatprep.subr.mxu0 0.0
        %907 = vmatpush2.msra.mxu0 0.0
        %908 = vmatprep.subr.mxu0 0.0
        %909 = vmatpush2.msra.mxu0 0.0
        %910 = vmatprep.subr.mxu0 0.0
        %911 = vmatpush2.msra.mxu0 0.0
        %912 = vmatprep.subr.mxu0 0.0
        %913 = vmatpush2.msra.mxu0 0.0
        %914 = vmatprep.subr.mxu0 0.0
        %915 = vmatpush2.msra.mxu0 0.0
        %916 = vmatprep.subr.mxu0 0.0
        %917 = vmatpush2.msra.mxu0 0.0
        %918 = vmatprep.subr.mxu0 0.0
        %919 = vmatpush2.msra.mxu0 0.0
        %920 = vmatprep.subr.mxu0 0.0
        %921 = vmatpush2.msra.mxu0 0.0
        %922 = vmatprep.subr.mxu0 0.0
        %923 = vmatpush2.msra.mxu0 0.0
        %924 = vmatprep.mubr.f32.mxu0 0.0
        %925 = vmatmul.mubr.f32.gmra.mxu0 %v831
        %v926 = vpop.f32.mrf.mxu0
        %v927 = vadd.f32 0.0, %v926
        %v928 = vpop.f32.mrf.mxu0
        %929 = vmatprep.mubr.f32.mxu0 0.0
        %930 = vmatmul.mubr.f32.gmra.mxu0 %v834
        %v931 = vpop.f32.mrf.mxu0
        %v932 = vadd.f32 0.0, %v931
        %v933 = vpop.f32.mrf.mxu0
        %934 = vmatprep.mubr.f32.mxu0 0.0
        %935 = vmatmul.mubr.f32.gmra.mxu0 %v837
        %v936 = vpop.f32.mrf.mxu0
        %v937 = vadd.f32 0.0, %v936
        %v938 = vpop.f32.mrf.mxu0
        %939 = vmatprep.mubr.f32.mxu0 0.0
        %940 = vmatmul.mubr.f32.gmra.mxu0 %v840
        %v941 = vpop.f32.mrf.mxu0
        %v942 = vadd.f32 0.0, %v941
        %v943 = vpop.f32.mrf.mxu0
        %944 = vmatprep.mubr.f32.mxu0 0.0
        %945 = vmatmul.mubr.f32.gmra.mxu0 %v843
        %v946 = vpop.f32.mrf.mxu0
        %v947 = vadd.f32 0.0, %v946
        %v948 = vpop.f32.mrf.mxu0
        %949 = vmatprep.mubr.f32.mxu0 0.0
        %950 = vmatmul.mubr.f32.gmra.mxu0 %v846
        %v951 = vpop.f32.mrf.mxu0
        %v952 = vadd.f32 0.0, %v951
        %v953 = vpop.f32.mrf.mxu0
        %954 = vmatprep.mubr.f32.mxu0 0.0
        %955 = vmatmul.mubr.f32.gmra.mxu0 %v849
        %v956 = vpop.f32.mrf.mxu0
        %v957 = vadd.f32 0.0, %v956
        %v958 = vpop.f32.mrf.mxu0
        %959 = vmatprep.mubr.f32.mxu0 0.0
        %960 = vmatmul.mubr.f32.gmra.mxu0 %v852
        %v961 = vpop.f32.mrf.mxu0
        %v962 = vadd.f32 0.0, %v961
        %v963 = vpop.f32.mrf.mxu0
        %964 = vmatprep.mubr.f32.mxu0 0.0
        %965 = vmatmul.mubr.f32.gmra.mxu0 %v855
        %v966 = vpop.f32.mrf.mxu0
        %v967 = vadd.f32 0.0, %v966
        %v968 = vpop.f32.mrf.mxu0
        %969 = vmatprep.mubr.f32.mxu0 0.0
        %970 = vmatmul.mubr.f32.gmra.mxu0 %v858
        %v971 = vpop.f32.mrf.mxu0
        %v972 = vadd.f32 0.0, %v971
        %v973 = vpop.f32.mrf.mxu0
        %974 = vdwg.mxu0
        %975 = vset.pattern.permute.xlu0 3
        %976 = vperm.xlu0 %975, %v176
        %v977 = vpop.permute.xlu0 %976
        %978 = vset.pattern.permute.xlu0 3
        %979 = vperm.xlu0 %978, %v178
        %v980 = vpop.permute.xlu0 %979
        %981 = vset.pattern.permute.xlu0 3
        %982 = vperm.xlu0 %981, %v180
        %v983 = vpop.permute.xlu0 %982
        %984 = vset.pattern.permute.xlu0 3
        %985 = vperm.xlu0 %984, %v182
        %v986 = vpop.permute.xlu0 %985
        %987 = vset.pattern.permute.xlu0 3
        %988 = vperm.xlu0 %987, %v184
        %v989 = vpop.permute.xlu0 %988
        %990 = vset.pattern.permute.xlu0 3
        %991 = vperm.xlu0 %990, %v186
        %v992 = vpop.permute.xlu0 %991
        %993 = vset.pattern.permute.xlu0 3
        %994 = vperm.xlu0 %993, %v188
        %v995 = vpop.permute.xlu0 %994
        %996 = vset.pattern.permute.xlu0 3
        %997 = vperm.xlu0 %996, %v190
        %v998 = vpop.permute.xlu0 %997
        %999 = vset.pattern.permute.xlu0 3
        %1000 = vperm.xlu0 %999, %v192
        %v1001 = vpop.permute.xlu0 %1000
        %1002 = vset.pattern.permute.xlu0 3
        %1003 = vperm.xlu0 %1002, %v194
        %v1004 = vpop.permute.xlu0 %1003
        %vm1005 = vcmp.eq.s32.totalorder %v206, %v977
        %vm1006 = vcmp.eq.s32.totalorder %v206, %v980
        %vm1007 = vcmp.eq.s32.totalorder %v206, %v983
        %vm1008 = vcmp.eq.s32.totalorder %v206, %v986
        %vm1009 = vcmp.eq.s32.totalorder %v206, %v989
        %vm1010 = vcmp.eq.s32.totalorder %v206, %v992
        %vm1011 = vcmp.eq.s32.totalorder %v206, %v995
        %vm1012 = vcmp.eq.s32.totalorder %v206, %v998
        %vm1013 = vcmp.eq.s32.totalorder %v206, %v1001
        %vm1014 = vcmp.eq.s32.totalorder %v206, %v1004
        %1015 = vset.pattern.permute.xlu0 7
        %1016 = vperm.xlu0 %1015, %v195
        %v1017 = vpop.permute.xlu0 %1016
        %1018 = vset.pattern.permute.xlu0 7
        %1019 = vperm.xlu0 %1018, %v196
        %v1020 = vpop.permute.xlu0 %1019
        %1021 = vset.pattern.permute.xlu0 7
        %1022 = vperm.xlu0 %1021, %v197
        %v1023 = vpop.permute.xlu0 %1022
        %1024 = vset.pattern.permute.xlu0 7
        %1025 = vperm.xlu0 %1024, %v198
        %v1026 = vpop.permute.xlu0 %1025
        %1027 = vset.pattern.permute.xlu0 7
        %1028 = vperm.xlu0 %1027, %v199
        %v1029 = vpop.permute.xlu0 %1028
        %1030 = vset.pattern.permute.xlu0 7
        %1031 = vperm.xlu0 %1030, %v200
        %v1032 = vpop.permute.xlu0 %1031
        %1033 = vset.pattern.permute.xlu0 7
        %1034 = vperm.xlu0 %1033, %v201
        %v1035 = vpop.permute.xlu0 %1034
        %1036 = vset.pattern.permute.xlu0 7
        %1037 = vperm.xlu0 %1036, %v202
        %v1038 = vpop.permute.xlu0 %1037
        %1039 = vset.pattern.permute.xlu0 7
        %1040 = vperm.xlu0 %1039, %v203
        %v1041 = vpop.permute.xlu0 %1040
        %1042 = vset.pattern.permute.xlu0 7
        %1043 = vperm.xlu0 %1042, %v204
        %v1044 = vpop.permute.xlu0 %1043
        %vm1045 = vcmp.eq.s32.totalorder %v206, %v1017
        %vm1046 = vcmp.eq.s32.totalorder %v206, %v1020
        %vm1047 = vcmp.eq.s32.totalorder %v206, %v1023
        %vm1048 = vcmp.eq.s32.totalorder %v206, %v1026
        %vm1049 = vcmp.eq.s32.totalorder %v206, %v1029
        %vm1050 = vcmp.eq.s32.totalorder %v206, %v1032
        %vm1051 = vcmp.eq.s32.totalorder %v206, %v1035
        %vm1052 = vcmp.eq.s32.totalorder %v206, %v1038
        %vm1053 = vcmp.eq.s32.totalorder %v206, %v1041
        %vm1054 = vcmp.eq.s32.totalorder %v206, %v1044
        %vm1055 = vmor %vm1005, %vm1045
        %vm1056 = vmor %vm1006, %vm1046
        %vm1057 = vmor %vm1007, %vm1047
        %vm1058 = vmor %vm1008, %vm1048
        %vm1059 = vmor %vm1009, %vm1049
        %vm1060 = vmor %vm1010, %vm1050
        %vm1061 = vmor %vm1011, %vm1051
        %vm1062 = vmor %vm1012, %vm1052
        %vm1063 = vmor %vm1013, %vm1053
        %vm1064 = vmor %vm1014, %vm1054
        %v1065 = vsel %vm1055, 1, 0
        %v1066 = vsel %vm1056, 1, 0
        %v1067 = vsel %vm1057, 1, 0
        %v1068 = vsel %vm1058, 1, 0
        %v1069 = vsel %vm1059, 1, 0
        %v1070 = vsel %vm1060, 1, 0
        %v1071 = vsel %vm1061, 1, 0
        %v1072 = vsel %vm1062, 1, 0
        %v1073 = vsel %vm1063, 1, 0
        %v1074 = vsel %vm1064, 1, 0
        %v1075 = vcvt.s32.f32 %v1065
        %v1076 = vcvt.s32.f32 %v1066
        %v1077 = vcvt.s32.f32 %v1067
        %v1078 = vcvt.s32.f32 %v1068
        %v1079 = vcvt.s32.f32 %v1069
        %v1080 = vcvt.s32.f32 %v1070
        %v1081 = vcvt.s32.f32 %v1071
        %v1082 = vcvt.s32.f32 %v1072
        %v1083 = vcvt.s32.f32 %v1073
        %v1084 = vcvt.s32.f32 %v1074
        %v1086 = vsel %vm319, %v1075, 0
        %v1089 = vsel %vm319, %v1076, 0
        %v1092 = vsel %vm319, %v1077, 0
        %v1095 = vsel %vm319, %v1078, 0
        %v1098 = vsel %vm319, %v1079, 0
        %v1101 = vsel %vm319, %v1080, 0
        %v1104 = vsel %vm319, %v1081, 0
        %v1107 = vsel %vm319, %v1082, 0
        %v1110 = vsel %vm319, %v1083, 0
        %v1113 = vsel %vm319, %v1084, 0
        %1115 = vmatprep.subr.mxu0 0.0
        %1116 = vmatpush1.msra.mxu0 0.0
        %1117 = vmatprep.subr.mxu0 0.0
        %1118 = vmatpush1.msra.mxu0 0.0
        %1119 = vmatprep.subr.mxu0 0.0
        %1120 = vmatpush1.msra.mxu0 0.0
        %1121 = vmatprep.subr.mxu0 0.0
        %1122 = vmatpush1.msra.mxu0 0.0
        %1123 = vmatprep.subr.mxu0 0.0
        %1124 = vmatpush1.msra.mxu0 0.0
        %1125 = vmatprep.subr.mxu0 0.0
        %1126 = vmatpush1.msra.mxu0 0.0
        %1127 = vmatprep.subr.mxu0 0.0
        %1128 = vmatpush1.msra.mxu0 0.0
        %1129 = vmatprep.subr.mxu0 0.0
        %1130 = vmatpush1.msra.mxu0 0.0
        %1131 = vmatprep.subr.mxu0 0.0
        %1132 = vmatpush1.msra.mxu0 0.0
        %1133 = vmatprep.subr.mxu0 0.0
        %1134 = vmatpush1.msra.mxu0 0.0
        %1135 = vmatprep.subr.mxu0 0.0
        %1136 = vmatpush1.msra.mxu0 0.0
        %1137 = vmatprep.subr.mxu0 0.0
        %1138 = vmatpush1.msra.mxu0 0.0
        %1139 = vmatprep.subr.mxu0 0.0
        %1140 = vmatpush1.msra.mxu0 0.0
        %1141 = vmatprep.subr.mxu0 0.0
        %1142 = vmatpush1.msra.mxu0 0.0
        %1143 = vmatprep.subr.mxu0 0.0
        %1144 = vmatpush1.msra.mxu0 %v318
        %1145 = vmatprep.subr.mxu0 0.0
        %1146 = vmatpush1.msra.mxu0 %v317
        %1147 = vmatprep.subr.mxu0 0.0
        %1148 = vmatpush2.msra.mxu0 0.0
        %1149 = vmatprep.subr.mxu0 0.0
        %1150 = vmatpush2.msra.mxu0 0.0
        %1151 = vmatprep.subr.mxu0 0.0
        %1152 = vmatpush2.msra.mxu0 0.0
        %1153 = vmatprep.subr.mxu0 0.0
        %1154 = vmatpush2.msra.mxu0 0.0
        %1155 = vmatprep.subr.mxu0 0.0
        %1156 = vmatpush2.msra.mxu0 0.0
        %1157 = vmatprep.subr.mxu0 0.0
        %1158 = vmatpush2.msra.mxu0 0.0
        %1159 = vmatprep.subr.mxu0 0.0
        %1160 = vmatpush2.msra.mxu0 0.0
        %1161 = vmatprep.subr.mxu0 0.0
        %1162 = vmatpush2.msra.mxu0 0.0
        %1163 = vmatprep.subr.mxu0 0.0
        %1164 = vmatpush2.msra.mxu0 0.0
        %1165 = vmatprep.subr.mxu0 0.0
        %1166 = vmatpush2.msra.mxu0 0.0
        %1167 = vmatprep.subr.mxu0 0.0
        %1168 = vmatpush2.msra.mxu0 0.0
        %1169 = vmatprep.subr.mxu0 0.0
        %1170 = vmatpush2.msra.mxu0 0.0
        %1171 = vmatprep.subr.mxu0 0.0
        %1172 = vmatpush2.msra.mxu0 0.0
        %1173 = vmatprep.subr.mxu0 0.0
        %1174 = vmatpush2.msra.mxu0 0.0
        %1175 = vmatprep.subr.mxu0 0.0
        %1176 = vmatpush2.msra.mxu0 0.0
        %1177 = vmatprep.subr.mxu0 0.0
        %1178 = vmatpush2.msra.mxu0 0.0
        %1179 = vmatprep.mubr.f32.mxu0 0.0
        %1180 = vmatmul.mubr.f32.gmra.mxu0 %v1086
        %v1181 = vpop.f32.mrf.mxu0
        %v1182 = vadd.f32 0.0, %v1181
        %v1183 = vpop.f32.mrf.mxu0
        %1184 = vmatprep.mubr.f32.mxu0 0.0
        %1185 = vmatmul.mubr.f32.gmra.mxu0 %v1089
        %v1186 = vpop.f32.mrf.mxu0
        %v1187 = vadd.f32 0.0, %v1186
        %v1188 = vpop.f32.mrf.mxu0
        %1189 = vmatprep.mubr.f32.mxu0 0.0
        %1190 = vmatmul.mubr.f32.gmra.mxu0 %v1092
        %v1191 = vpop.f32.mrf.mxu0
        %v1192 = vadd.f32 0.0, %v1191
        %v1193 = vpop.f32.mrf.mxu0
        %1194 = vmatprep.mubr.f32.mxu0 0.0
        %1195 = vmatmul.mubr.f32.gmra.mxu0 %v1095
        %v1196 = vpop.f32.mrf.mxu0
        %v1197 = vadd.f32 0.0, %v1196
        %v1198 = vpop.f32.mrf.mxu0
        %1199 = vmatprep.mubr.f32.mxu0 0.0
        %1200 = vmatmul.mubr.f32.gmra.mxu0 %v1098
        %v1201 = vpop.f32.mrf.mxu0
        %v1202 = vadd.f32 0.0, %v1201
        %v1203 = vpop.f32.mrf.mxu0
        %1204 = vmatprep.mubr.f32.mxu0 0.0
        %1205 = vmatmul.mubr.f32.gmra.mxu0 %v1101
        %v1206 = vpop.f32.mrf.mxu0
        %v1207 = vadd.f32 0.0, %v1206
        %v1208 = vpop.f32.mrf.mxu0
        %1209 = vmatprep.mubr.f32.mxu0 0.0
        %1210 = vmatmul.mubr.f32.gmra.mxu0 %v1104
        %v1211 = vpop.f32.mrf.mxu0
        %v1212 = vadd.f32 0.0, %v1211
        %v1213 = vpop.f32.mrf.mxu0
        %1214 = vmatprep.mubr.f32.mxu0 0.0
        %1215 = vmatmul.mubr.f32.gmra.mxu0 %v1107
        %v1216 = vpop.f32.mrf.mxu0
        %v1217 = vadd.f32 0.0, %v1216
        %v1218 = vpop.f32.mrf.mxu0
        %1219 = vmatprep.mubr.f32.mxu0 0.0
        %1220 = vmatmul.mubr.f32.gmra.mxu0 %v1110
        %v1221 = vpop.f32.mrf.mxu0
        %v1222 = vadd.f32 0.0, %v1221
        %v1223 = vpop.f32.mrf.mxu0
        %1224 = vmatprep.mubr.f32.mxu0 0.0
        %1225 = vmatmul.mubr.f32.gmra.mxu0 %v1113
        %v1226 = vpop.f32.mrf.mxu0
        %v1227 = vadd.f32 0.0, %v1226
        %v1228 = vpop.f32.mrf.mxu0
        %1229 = vdwg.mxu0
        %1240 = vrot.lane.b32.xlu0 %v672, 32
        %v1241 = vpop.permute.xlu0 %1240
        %1242 = vrot.lane.b32.xlu0 %v677, 32
        %v1243 = vpop.permute.xlu0 %1242
        %1244 = vrot.lane.b32.xlu0 %v682, 32
        %v1245 = vpop.permute.xlu0 %1244
        %1246 = vrot.lane.b32.xlu0 %v687, 32
        %v1247 = vpop.permute.xlu0 %1246
        %1248 = vrot.lane.b32.xlu0 %v692, 32
        %v1249 = vpop.permute.xlu0 %1248
        %1250 = vrot.lane.b32.xlu0 %v697, 32
        %v1251 = vpop.permute.xlu0 %1250
        %1252 = vrot.lane.b32.xlu0 %v702, 32
        %v1253 = vpop.permute.xlu0 %1252
        %1254 = vrot.lane.b32.xlu0 %v707, 32
        %v1255 = vpop.permute.xlu0 %1254
        %1256 = vrot.lane.b32.xlu0 %v712, 32
        %v1257 = vpop.permute.xlu0 %1256
        %1258 = vrot.lane.b32.xlu0 %v717, 32
        %v1259 = vpop.permute.xlu0 %1258
        %1280 = vrot.lane.b32.xlu0 %v927, 64
        %v1281 = vpop.permute.xlu0 %1280
        %1282 = vrot.lane.b32.xlu0 %v932, 64
        %v1283 = vpop.permute.xlu0 %1282
        %1284 = vrot.lane.b32.xlu0 %v937, 64
        %v1285 = vpop.permute.xlu0 %1284
        %1286 = vrot.lane.b32.xlu0 %v942, 64
        %v1287 = vpop.permute.xlu0 %1286
        %1288 = vrot.lane.b32.xlu0 %v947, 64
        %v1289 = vpop.permute.xlu0 %1288
        %1290 = vrot.lane.b32.xlu0 %v952, 64
        %v1291 = vpop.permute.xlu0 %1290
        %1292 = vrot.lane.b32.xlu0 %v957, 64
        %v1293 = vpop.permute.xlu0 %1292
        %1294 = vrot.lane.b32.xlu0 %v962, 64
        %v1295 = vpop.permute.xlu0 %1294
        %1296 = vrot.lane.b32.xlu0 %v967, 64
        %v1297 = vpop.permute.xlu0 %1296
        %1298 = vrot.lane.b32.xlu0 %v972, 64
        %v1299 = vpop.permute.xlu0 %1298
        %1320 = vrot.lane.b32.xlu0 %v1182, 96
        %v1321 = vpop.permute.xlu0 %1320
        %1322 = vrot.lane.b32.xlu0 %v1187, 96
        %v1323 = vpop.permute.xlu0 %1322
        %1324 = vrot.lane.b32.xlu0 %v1192, 96
        %v1325 = vpop.permute.xlu0 %1324
        %1326 = vrot.lane.b32.xlu0 %v1197, 96
        %v1327 = vpop.permute.xlu0 %1326
        %1328 = vrot.lane.b32.xlu0 %v1202, 96
        %v1329 = vpop.permute.xlu0 %1328
        %1330 = vrot.lane.b32.xlu0 %v1207, 96
        %v1331 = vpop.permute.xlu0 %1330
        %1332 = vrot.lane.b32.xlu0 %v1212, 96
        %v1333 = vpop.permute.xlu0 %1332
        %1334 = vrot.lane.b32.xlu0 %v1217, 96
        %v1335 = vpop.permute.xlu0 %1334
        %1336 = vrot.lane.b32.xlu0 %v1222, 96
        %v1337 = vpop.permute.xlu0 %1336
        %1338 = vrot.lane.b32.xlu0 %v1227, 96
        %v1339 = vpop.permute.xlu0 %1338
        %vm1350 = vcmask 261120
        %v1351 = vsel %vm1350, %v417, %v1241
        %v1352 = vsel %vm1350, %v422, %v1243
        %v1353 = vsel %vm1350, %v427, %v1245
        %v1354 = vsel %vm1350, %v432, %v1247
        %v1355 = vsel %vm1350, %v437, %v1249
        %v1356 = vsel %vm1350, %v442, %v1251
        %v1357 = vsel %vm1350, %v447, %v1253
        %v1358 = vsel %vm1350, %v452, %v1255
        %v1359 = vsel %vm1350, %v457, %v1257
        %v1360 = vsel %vm1350, %v462, %v1259
        %vm1361 = vcmask 523264
        %v1362 = vsel %vm1361, %v1351, %v1281
        %v1363 = vsel %vm1361, %v1352, %v1283
        %v1364 = vsel %vm1361, %v1353, %v1285
        %v1365 = vsel %vm1361, %v1354, %v1287
        %v1366 = vsel %vm1361, %v1355, %v1289
        %v1367 = vsel %vm1361, %v1356, %v1291
        %v1368 = vsel %vm1361, %v1357, %v1293
        %v1369 = vsel %vm1361, %v1358, %v1295
        %v1370 = vsel %vm1361, %v1359, %v1297
        %v1371 = vsel %vm1361, %v1360, %v1299
        %vm1372 = vcmask 785408
        %v1373 = vsel %vm1372, %v1362, %v1321
        %v1374 = vsel %vm1372, %v1363, %v1323
        %v1375 = vsel %vm1372, %v1364, %v1325
        %v1376 = vsel %vm1372, %v1365, %v1327
        %v1377 = vsel %vm1372, %v1366, %v1329
        %v1378 = vsel %vm1372, %v1367, %v1331
        %v1379 = vsel %vm1372, %v1368, %v1333
        %v1380 = vsel %vm1372, %v1369, %v1335
        %v1381 = vsel %vm1372, %v1370, %v1337
        %v1382 = vsel %vm1372, %v1371, %v1339
        %1383 = vst [vmem:[%s137] sm:$0xff] %v1373
        %1384 = vst [vmem:[%s137 + $0x8] sm:$0xff] %v1374
        %1385 = vst [vmem:[%s137 + $0x10] sm:$0xff] %v1375
        %1386 = vst [vmem:[%s137 + $0x18] sm:$0xff] %v1376
        %1387 = vst [vmem:[%s137 + $0x20] sm:$0xff] %v1377
        %1388 = vst [vmem:[%s137 + $0x28] sm:$0xff] %v1378
        %1389 = vst [vmem:[%s137 + $0x30] sm:$0xff] %v1379
        %1390 = vst [vmem:[%s137 + $0x38] sm:$0xff] %v1380
        %1391 = vst [vmem:[%s137 + $0x40] sm:$0xff] %v1381
        %1392 = vst [vmem:[%s137 + $0x48] sm:$0xff] %v1382
        %s1393 = sand.u32 %s71, 1
        %s1394 = scalar_lea.sflag [#allocation3], %s1393
        %s1395 = sand.u32 %s71, 1
        %s1396 = smul.addr %s1395, 80
        %s1397 = scalar_lea.vmem [#allocation2], %s1396
        // Predicated region
        $region29: #{tpu_custom_call.1} parent=27 // pred_check
          %p1398 = pneg %p81
        $region30: #{tpu_custom_call.1} parent=27 // pred_check_branch
          %1400 = sbr.rel (%p1398) target = $region32
        $region31: #{tpu_custom_call.1} parent=27 // pred_region
          %s1401 = smul.u32 10, %s16
          %s1403 = ssub.s32 1280, 1280
          %1404 = vsyncadd %s1394, %s1403
          %s1405 = smul.addr %s1401, 128
          %s1406 = scalar_lea.hbm %s2, %s1405
          %s1407 = sshll.u32 %s1397, 4
          %s1408 = int_to_ptr.vmem [resolvable:$true] %s1407
          %1413 = dma.vmem_to_hbm [thread:$0]  %s1408, 1280, %s1406, %s1394, 128, 128, 8
        $region32: #{tpu_custom_call.1} parent=27 // pred_fallthru
          _
      $region28: #{tpu_custom_call.1} parent=5 // pred_fallthru
        _
      %p1414 = scmp.le.s32.totalorder 2, %s11
      // Predicated region
      $region33: #{tpu_custom_call.1} parent=5 // pred_check
        %p1415 = pneg %p1414
      $region34: #{tpu_custom_call.1} parent=5 // pred_check_branch
        %1417 = sbr.rel (%p1415) target = $region36
      $region35: #{tpu_custom_call.1} parent=5 // pred_region
        %s1418 = ssub.s32 %s11, 2
        // Predicated region
        $region37: #{tpu_custom_call.1} parent=35 // pred_check
          %p1419 = pneg %p87
        $region38: #{tpu_custom_call.1} parent=35 // pred_check_branch
          %1421 = sbr.rel (%p1419) target = $region40
        $region39: #{tpu_custom_call.1} parent=35 // pred_region
          %s1422 = sand.u32 %s72, 1
          %s1423 = scalar_lea.sflag [#allocation3], %s1422
          %s1424 = sand.u32 %s72, 1
          %s1425 = smul.addr %s1424, 80
          %s1426 = scalar_lea.vmem [#allocation2], %s1425
          %1427 = dma.done %s1423, 1280
        $region40: #{tpu_custom_call.1} parent=35 // pred_fallthru
          _
      $region36: #{tpu_custom_call.1} parent=5 // pred_fallthru
        _
    $region6: #{tpu_custom_call.1} parent=1 // loop_footer
      %s15 = sadd.s32 1, %s11
    $region7: #{tpu_custom_call.1} parent=1 // loop_footer_branch
      %10 = sbr.rel target = $region3
    $region8: #{tpu_custom_call.1} parent=1 // loop_exit
      _
    %1428 = vsyncpa [#allocation3], 1
    %s1429 = scalar_lea.sflag [#allocation3], 1
    %1430 = vsyncpa %s1429, 1

</llo_original>
